<compile_context>
chip_gen: v5e
topology: v5e:2x2
jax: 0.10.0
libtpu: 0.0.40
codegen_flags: <defaults>
</compile_context>

<pallas_src>
import functools

import jax
import jax.numpy as jnp
from jax.experimental import pallas as pl
from jax.experimental.pallas import tpu as pltpu


def _masked_max_kernel(x_ref, m_ref, o_ref, *, seq_len, seq_tile, need_seq_mask):
    # x_ref: (TB, TS, TH)  hidden-state tile
    # m_ref: (TB, TS, 1)   attention-mask tile (any dtype, 0 = masked)
    # o_ref: (TB, 1, TH)   resident running-max accumulator / output tile
    s_idx = pl.program_id(2)

    @pl.when(s_idx == 0)
    def _():
        o_ref[...] = jnp.full(o_ref.shape, -jnp.inf, o_ref.dtype)

    x = x_ref[...]
    m = m_ref[...]
    sentinel = jnp.asarray(-10000.0, x.dtype)       # PyTorch masked value

    if need_seq_mask:
        # Narrow (TB, TS, 1) work only; a single wide select over (TB, TS, TH).
        row = jax.lax.broadcasted_iota(jnp.int32, m.shape, 1)
        in_range = (s_idx * seq_tile + row) < seq_len
        keep = jnp.logical_and(m != 0, in_range)
        fill = jnp.where(in_range, sentinel, jnp.asarray(-jnp.inf, x.dtype))
        masked = jnp.where(keep, x, fill)
    else:
        masked = jnp.where(m != 0, x, sentinel)

    tile_max = jnp.max(masked, axis=1, keepdims=True)        # (TB, 1, TH)
    o_ref[...] = jnp.maximum(o_ref[...], tile_max)


def _vmem_capacity_bytes():
    try:
        info = pltpu.get_tpu_info()
        cap = getattr(info, "vmem_capacity_bytes", None)
        if cap:
            return int(cap)
    except Exception:
        pass
    return 64 << 20   # conservative: assume v7x-sized VMEM


_MASK_ROW_BYTES = 128 * 4       # (TS, 1) int32 mask pads to 128 lanes in VMEM


def _choose_tiles(B, S, H, itemsize, budget):
    """Pick (TB, TS, TH).  One (x + lane-padded mask) tile stays <= budget."""
    pack = max(8, 32 // itemsize)               # sublane packing multiple
    lane_cap = 2048

    # Hidden tile: lane-dense, prefer an exact divisor of H (no ragged h tile).
    if H <= lane_cap:
        th = H
    else:
        th = None
        for cand in range(lane_cap, 127, -128):
            if H % cand == 0:
                th = cand
                break
        if th is None:
            th = lane_cap                        # ragged last h tile (clipped)

    row_bytes = th * itemsize + _MASK_ROW_BYTES
    ts_cap = max(pack, budget // row_bytes)
    if S <= ts_cap:
        ts = S
    else:
        ts = max(pack, (ts_cap // pack) * pack)
        ts = min(ts, S)

    # Batch blocking: only when one whole (S, H) example fits in a single tile.
    tb = 1
    if ts == S and th == H:
        per_example = max(1, S * row_bytes)
        tb = max(1, min(B, budget // per_example))
    return tb, ts, th


def max_pooling(last_hidden_state, attention_mask, *,
                batch_tile=None, seq_tile=None, hidden_tile=None):
    """last_hidden_state: (B, S, H); attention_mask: (B, S) -> (B, H)."""
    B, S, H = last_hidden_state.shape
    dtype = last_hidden_state.dtype
    itemsize = jnp.dtype(dtype).itemsize

    phys_vmem = _vmem_capacity_bytes()
    # Per-x-tile budget: ~12 MiB on 128 MiB-VMEM parts (v5e/v6e), ~8 MiB on v7x.
    budget = (12 << 20) if phys_vmem >= (100 << 20) else (8 << 20)

    tb_auto, ts_auto, th_auto = _choose_tiles(B, S, H, itemsize, budget)
    TS = min(seq_tile or ts_auto, S)
    TH = min(hidden_tile or th_auto, H)
    if batch_tile is not None:
        TB = min(batch_tile, B)
    elif TS == S and TH == H:
        TB = tb_auto
    else:
        TB = 1

    n_b = pl.cdiv(B, TB)
    n_h = pl.cdiv(H, TH)
    n_s = pl.cdiv(S, TS)

    # v7x dual-TC: guarantee >= 2 steps on the parallel axes when possible.
    if n_b * n_h == 1 and TH == H and H % 256 == 0:
        TH = H // 2
        n_h = 2

    need_seq_mask = (S % TS) != 0

    # Mask as a (B, S, 1) view in its native dtype (no extra XLA cast pass).
    mask3 = attention_mask.reshape(B, S, 1)

    # Explicit scoped-VMEM limit: 2x (x + lane-padded mask + sublane-padded out).
    x_tile = TB * TS * TH * itemsize
    m_tile = TB * TS * _MASK_ROW_BYTES
    o_tile = TB * 8 * TH * itemsize
    needed = 2 * (x_tile + m_tile + o_tile)
    vmem_cap = (phys_vmem * 3) // 4
    vmem_limit = int(min(max(needed * 5 // 4 + (4 << 20), 32 << 20), vmem_cap))

    kernel = functools.partial(
        _masked_max_kernel, seq_len=S, seq_tile=TS, need_seq_mask=need_seq_mask
    )

    out = pl.pallas_call(
        kernel,
        out_shape=jax.ShapeDtypeStruct((B, 1, H), dtype),
        grid_spec=pltpu.PrefetchScalarGridSpec(
            num_scalar_prefetch=0,
            grid=(n_b, n_h, n_s),                         # reduction (S) axis last
            in_specs=[
                pl.BlockSpec((TB, TS, TH), lambda b, h, s: (b, s, h)),
                pl.BlockSpec((TB, TS, 1), lambda b, h, s: (b, s, 0)),
            ],
            out_specs=pl.BlockSpec((TB, 1, TH), lambda b, h, s: (b, 0, h)),
        ),
        compiler_params=pltpu.CompilerParams(
            dimension_semantics=("parallel", "parallel", "arbitrary"),
            vmem_limit_bytes=vmem_limit,
        ),
    )(last_hidden_state, mask3)

    return out.reshape(B, H)


def _reference(last_hidden_state, attention_mask):
    m = attention_mask[..., None]
    masked = jnp.where(
        m == 0, jnp.asarray(-10000.0, last_hidden_state.dtype), last_hidden_state
    )
    return jnp.max(masked, axis=1)


if __name__ == "__main__":
    B, S, H = 2, 8, 32
    key = jax.random.PRNGKey(0)
    k_x, _ = jax.random.split(key)

    last_hidden_state = jax.random.normal(k_x, (B, S, H), dtype=jnp.float32)

    # Deterministic mask: first batch element has 5 valid tokens, second has 3.
    lengths = jnp.array([5, 3], dtype=jnp.int32)
    attention_mask = (jnp.arange(S)[None, :] < lengths[:, None]).astype(jnp.int32)

    out = max_pooling(last_hidden_state, attention_mask)
    out = jax.block_until_ready(out)

    ref = _reference(last_hidden_state, attention_mask)
    assert out.shape == (B, H)
    assert jnp.allclose(out, ref, atol=1e-6), "Pallas output mismatch vs reference"

    # Also exercise the tiled-reduction path (multi-step S with a ragged tail),
    # which is the configuration that matters at production sequence lengths.
    S2 = 12
    x2 = jax.random.normal(jax.random.PRNGKey(1), (B, S2, H), dtype=jnp.float32)
    lengths2 = jnp.array([10, 12], dtype=jnp.int32)
    mask2 = (jnp.arange(S2)[None, :] < lengths2[:, None]).astype(jnp.int32)
    out2 = jax.block_until_ready(
        max_pooling(x2, mask2, batch_tile=1, seq_tile=8)
    )
    ref2 = _reference(x2, mask2)
    assert out2.shape == (B, H)
    assert jnp.allclose(out2, ref2, atol=1e-6), "Pallas tiled-path mismatch vs reference"

    print("KERNEL_OK")
</pallas_src>

<mosaic_0001>
module attributes {stable_mosaic.version = 11 : i64} {
  func.func @_masked_max_kernel(%arg0: i32, %arg1: i32, %arg2: i32, %arg3: memref<2x8x32xf32, #tpu.memory_space<vmem>>, %arg4: memref<2x8x1xi32, #tpu.memory_space<vmem>>, %arg5: memref<2x1x32xf32, #tpu.memory_space<vmem>>) attributes {dimension_semantics = [#tpu.dimension_semantics<parallel>, #tpu.dimension_semantics<parallel>, #tpu.dimension_semantics<arbitrary>], iteration_bounds = array<i64: 1, 1, 1>, scalar_prefetch = 0 : i64, scratch_operands = 0 : i64, tpu.core_type = #tpu.core_type<tc>, window_params = [{transform_indices = @transform_0, window_bounds = array<i64: 2, 8, 32>}, {transform_indices = @transform_1, window_bounds = array<i64: 2, 8, 1>}, {transform_indices = @transform_2, window_bounds = array<i64: 2, 1, 32>}]} {
    %c0_i32 = arith.constant 0 : i32
    %0 = arith.cmpi eq, %arg2, %c0_i32 : i32
    %1 = arith.extui %0 : i1 to i32
    %c0_i32_0 = arith.constant 0 : i32
    %2 = arith.cmpi ne, %1, %c0_i32_0 : i32
    scf.if %2 {
      %cst_14 = arith.constant 0xFF800000 : f32
      %16 = vector.broadcast %cst_14 : f32 to vector<2x1x32xf32>
      %c0_15 = arith.constant 0 : index
      %c0_16 = arith.constant 0 : index
      %c0_17 = arith.constant 0 : index
      %17 = vector.load %arg5[%c0_15, %c0_16, %c0_17] : memref<2x1x32xf32, #tpu.memory_space<vmem>>, vector<2x1x32xf32>
      tpu.vector_store %arg5[%c0_15, %c0_16, %c0_17], %16 {strides = array<i32>} : memref<2x1x32xf32, #tpu.memory_space<vmem>>, vector<2x1x32xf32>,
    } else {
    }
    %c0 = arith.constant 0 : index
    %c0_1 = arith.constant 0 : index
    %c0_2 = arith.constant 0 : index
    %3 = vector.load %arg3[%c0, %c0_1, %c0_2] : memref<2x8x32xf32, #tpu.memory_space<vmem>>, vector<2x8x32xf32>
    %c0_3 = arith.constant 0 : index
    %c0_4 = arith.constant 0 : index
    %c0_5 = arith.constant 0 : index
    %4 = vector.load %arg4[%c0_3, %c0_4, %c0_5] : memref<2x8x1xi32, #tpu.memory_space<vmem>>, vector<2x8x1xi32>
    %c0_i32_6 = arith.constant 0 : i32
    %5 = vector.broadcast %c0_i32_6 : i32 to vector<2x8x1xi32>
    %6 = arith.cmpi ne, %4, %5 : vector<2x8x1xi32>
    %cst = arith.constant -1.000000e+04 : f32
    %7 = vector.shape_cast %6 : vector<2x8x1xi1> to vector<2x8x1xi1>
    %8 = vector.broadcast %7 : vector<2x8x1xi1> to vector<2x8x32xi1>
    %9 = vector.broadcast %cst : f32 to vector<2x8x32xf32>
    %10 = arith.select %8, %3, %9 : vector<2x8x32xi1>, vector<2x8x32xf32>
    %cst_7 = arith.constant dense<0xFF800000> : vector<2x32xf32>
    %11 = vector.multi_reduction <maximumf>, %10, %cst_7 [1] : vector<2x8x32xf32> to vector<2x32xf32>
    %12 = vector.shape_cast %11 : vector<2x32xf32> to vector<2x1x32xf32>
    %c0_8 = arith.constant 0 : index
    %c0_9 = arith.constant 0 : index
    %c0_10 = arith.constant 0 : index
    %13 = vector.load %arg5[%c0_8, %c0_9, %c0_10] : memref<2x1x32xf32, #tpu.memory_space<vmem>>, vector<2x1x32xf32>
    %14 = arith.maximumf %13, %12 : vector<2x1x32xf32>
    %c0_11 = arith.constant 0 : index
    %c0_12 = arith.constant 0 : index
    %c0_13 = arith.constant 0 : index
    %15 = vector.load %arg5[%c0_11, %c0_12, %c0_13] : memref<2x1x32xf32, #tpu.memory_space<vmem>>, vector<2x1x32xf32>
    tpu.vector_store %arg5[%c0_11, %c0_12, %c0_13], %14 {strides = array<i32>} : memref<2x1x32xf32, #tpu.memory_space<vmem>>, vector<2x1x32xf32>,
    return
  }
  func.func @transform_0(%arg0: i32, %arg1: i32, %arg2: i32) -> (i32, i32, i32) {
    %c0_i32 = arith.constant 0 : i32
    return %arg0, %arg2, %arg1 : i32, i32, i32
  }
  func.func @transform_1(%arg0: i32, %arg1: i32, %arg2: i32) -> (i32, i32, i32) {
    %c0_i32 = arith.constant 0 : i32
    %c0_i32_0 = arith.constant 0 : i32
    return %arg0, %arg2, %c0_i32 : i32, i32, i32
  }
  func.func @transform_2(%arg0: i32, %arg1: i32, %arg2: i32) -> (i32, i32, i32) {
    %c0_i32 = arith.constant 0 : i32
    %c0_i32_0 = arith.constant 0 : i32
    return %arg0, %c0_i32, %arg1 : i32, i32, i32
  }
}

</mosaic_0001>

<llo_original>
// kernel: tpu_custom_call.1
$region0: #{tpu_custom_call.1}
  #allocation0 [shape = 'u32[]', space=smem, size = 0x4, offset = 0x4, fixed_abs, tag = 'smem constant byte address 0x4 - core index']
  #allocation1 [shape = 'u32[72,128]{1,0:T(1,128)}', space=vmem, size = 0x9000, scoped, tag = 'internal scratch']
  %s0 = inlined_call_operand.vmem [shape: f32[2,8,32], index: 0, kind: input, shape index: {}]
  %s1 = inlined_call_operand.vmem [shape: s32[2,8,1], index: 1, kind: input, shape index: {}]
  %s2 = inlined_call_operand.hbm [shape: f32[2,1,32], index: 2, kind: output, shape index: {}]
  %s3 = sld [smem:[#allocation0]]
  $region22: #{tpu_custom_call.1} parent=0
    _
  %s5 = ssub.s32 1, %s3
  %s6 = scalar_select 0, %s5, %s3
  $region1: #{tpu_custom_call.1} parent=0
    #allocation2 [shape = 'u8[1024]{0}', space=vmem, size = 0x400, scoped, tag = 'output window, operand 0, single buffered']
    #allocation3 [shape = 's32[1]{0}', space=sflag, size = 0x4, scoped, tag = 'scoped memory for tpu_custom_call.1']
    %7 = vsyncpa [#allocation3], 0
    // Predicated region
    $region2: #{tpu_custom_call.1} parent=1 // pred_check
      _
    $region3: #{tpu_custom_call.1} parent=1 // pred_check_branch
      %9 = sbr.rel (0) target = $region5
    $region4: #{tpu_custom_call.1} parent=1 // pred_region
      _
    $region5: #{tpu_custom_call.1} parent=1 // pred_fallthru
      _
    // Predicated region
    $region6: #{tpu_custom_call.1} parent=1 // pred_check
      _
    $region7: #{tpu_custom_call.1} parent=1 // pred_check_branch
      %11 = sbr.rel (0) target = $region9
    $region8: #{tpu_custom_call.1} parent=1 // pred_region
      _
    $region9: #{tpu_custom_call.1} parent=1 // pred_fallthru
      _
    %p12 = scmp.eq.s32.totalorder 0, 0
    // Predicated region
    $region10: #{tpu_custom_call.1} parent=1 // pred_check
      %p13 = pneg %p12
    $region11: #{tpu_custom_call.1} parent=1 // pred_check_branch
      %15 = sbr.rel (%p13) target = $region13
    $region12: #{tpu_custom_call.1} parent=1 // pred_region
      %vm16 = vcmask 253952
      %17 = vst.msk [vmem:[#allocation2] sm:$0x1] %vm16, -inf
      %18 = vst.msk [vmem:[#allocation2 + $0x1] sm:$0x1] %vm16, -inf
    $region13: #{tpu_custom_call.1} parent=1 // pred_fallthru
      _
    %v19 = vld [vmem:[%s0] sm:$0xff]
    %v20 = vld [vmem:[%s0 + $0x8] sm:$0xff]
    %v21 = vld [vmem:[%s1] sm:$0xff]
    %v22 = vld [vmem:[%s1 + $0x8] sm:$0xff]
    %vm23 = vcmp.ne.s32.totalorder %v21, 0
    %vm24 = vcmp.ne.s32.totalorder %v22, 0
    %v25 = vsel %vm23, 1, 0
    %v26 = vsel %vm24, 1, 0
    %27 = vset.pattern.permute.xlu0 0
    %28 = vperm.xlu0 %27, %v25
    %v29 = vpop.permute.xlu0 %28
    %30 = vset.pattern.permute.xlu0 0
    %31 = vperm.xlu0 %30, %v26
    %v32 = vpop.permute.xlu0 %31
    %vm33 = vcmp.eq.s32.totalorder %v29, 1
    %vm34 = vcmp.eq.s32.totalorder %v32, 1
    %v35 = vsel %vm33, %v19, -10000.0
    %v36 = vsel %vm34, %v20, -10000.0
    %vm37 = vcmask 261120
    %v38 = vsel %vm37, %v35, -inf
    %v39 = vrot.slane %v38, 4
    %v40 = vmax.f32 %v38, %v39
    %v41 = vrot.slane %v40, 2
    %v42 = vmax.f32 %v40, %v41
    %v43 = vrot.slane %v42, 1
    %v44 = vmax.f32 %v42, %v43
    %v45 = vsel %vm37, %v36, -inf
    %v46 = vrot.slane %v45, 4
    %v47 = vmax.f32 %v45, %v46
    %v48 = vrot.slane %v47, 2
    %v49 = vmax.f32 %v47, %v48
    %v50 = vrot.slane %v49, 1
    %v51 = vmax.f32 %v49, %v50
    %v52 = vld [vmem:[#allocation2] sm:$0x1]
    %v53 = vld [vmem:[#allocation2 + $0x1] sm:$0x1]
    %v54 = vmax.f32 %v52, %v44
    %v55 = vmax.f32 %v53, %v51
    %vm56 = vcmask 253952
    %57 = vst.msk [vmem:[#allocation2] sm:$0x1] %vm56, %v54
    %58 = vst.msk [vmem:[#allocation2 + $0x1] sm:$0x1] %vm56, %v55
    // Predicated region
    $region14: #{tpu_custom_call.1} parent=1 // pred_check
      _
    $region15: #{tpu_custom_call.1} parent=1 // pred_check_branch
      %60 = sbr.rel (0) target = $region17
    $region16: #{tpu_custom_call.1} parent=1 // pred_region
      %62 = vsyncadd [#allocation3], 0
      %s63 = sshll.u32 [#allocation2], 4
      %s64 = int_to_ptr.vmem [resolvable:$true] %s63
      %s65 = sshll.u32 %s2, 4
      %s66 = int_to_ptr.hbm [resolvable:$true] %s65
      %71 = dma.vmem_to_hbm [thread:$0]  %s64, 32, %s66, [#allocation3], 16, 16, 1
    $region17: #{tpu_custom_call.1} parent=1 // pred_fallthru
      _
    // Predicated region
    $region18: #{tpu_custom_call.1} parent=1 // pred_check
      _
    $region19: #{tpu_custom_call.1} parent=1 // pred_check_branch
      %73 = sbr.rel (0) target = $region21
    $region20: #{tpu_custom_call.1} parent=1 // pred_region
      %75 = dma.done [#allocation3], 32
    $region21: #{tpu_custom_call.1} parent=1 // pred_fallthru
      _
    %76 = vsyncpa [#allocation3], 1

</llo_original>
